<compile_context>
chip_gen: v5e
topology: v5e:2x2
jax: 0.10.0
libtpu: 0.0.40
codegen_flags: <defaults>
</compile_context>

<pallas_src>
import jax
import jax.numpy as jnp
from jax import lax
from jax.experimental import pallas as pl
from jax.experimental.pallas import tpu as pltpu


def _contrastive_kernel(imgs_ref, caps_t_ref, mdc_ref, mdr_ref, out_ref, acc_ref):
    j = pl.program_id(1)                      # column-tile index (reduction axis)

    @pl.when(j == 0)
    def _():
        acc_ref[...] = jnp.zeros_like(acc_ref)

    # (TILE_M, D) x (D, TILE_N) in the input dtype; f32 accumulation on the MXU.
    scores = lax.dot_general(
        imgs_ref[...], caps_t_ref[...],
        dimension_numbers=(((1,), (0,)), ((), ())),
        preferred_element_type=jnp.float32,
    )

    md_col = mdc_ref[...]                     # (TILE_M, 1) f32: margin - diag[row]
    md_row = mdr_ref[...]                     # (1, TILE_N) f32: margin - diag[col]

    # Fused cost_s + cost_im (diagonal & padding handled algebraically outside).
    cost = (jnp.maximum(md_row + scores, 0.0)
            + jnp.maximum(md_col + scores, 0.0))

    # Sublane-only partial reduction; lanes act as commutative buckets.
    acc_ref[...] += jnp.sum(cost, axis=0, keepdims=True)

    # Cross-lane reduce + scalar store only once per row tile.
    @pl.when(j == pl.num_programs(1) - 1)
    def _():
        out_ref[0] = jnp.sum(acc_ref[...], keepdims=True)


def _round_up(x, m):
    return (x + m - 1) // m * m


def _vmem_capacity_bytes():
    # Generation-aware VMEM capacity (v5e/v6e: 128 MiB, v7x: 64 MiB).
    try:
        return int(pltpu.get_tpu_info().vmem_capacity_bytes)
    except Exception:
        return 64 * 1024 * 1024               # conservative (v7x-sized) fallback


def _vmem_estimate(tile_m, tile_n, d, itemsize):
    need = 2 * tile_m * d * itemsize          # imgs block, double-buffered
    need += 2 * tile_n * d * itemsize         # caps^T block, double-buffered
    need += 4 * tile_m * tile_n * 4           # scores / cost / relu temporaries (f32)
    need += 2 * (tile_m + tile_n) * 4 + tile_n * 4 + 4096
    return need


def _choose_row_tile(n, d, itemsize, budget):
    if n <= 128:
        return n                              # single tile; block == full array is legal
    for t in (1024, 512, 256, 128):
        if t > _round_up(n, 128):
            continue
        if _vmem_estimate(t, t, d, itemsize) <= budget:
            return t
    return 128


def contrastive_loss(imgs, caps, margin=0.2, caps_resident=None):
    n, d = imgs.shape
    assert caps.shape == (n, d)
    margin = float(margin)
    itemsize = jnp.dtype(imgs.dtype).itemsize

    # O(N*D) diagonal of imgs @ caps.T, computed once (f32), never from the NxN matrix.
    diag = jnp.sum(imgs.astype(jnp.float32) * caps.astype(jnp.float32), axis=-1)
    md = margin - diag                        # (n,) f32

    vmem_cap = max(_vmem_capacity_bytes(), 64 * 1024 * 1024)
    budget = min(int(0.4 * vmem_cap), 96 * 1024 * 1024)

    tile_m = _choose_row_tile(n, d, itemsize, budget)
    n_pad = _round_up(n, tile_m)
    pad = n_pad - n

    # Keep caps VMEM-resident (one column tile, constant block index) when it fits.
    if caps_resident is None:
        caps_resident = _vmem_estimate(tile_m, n_pad, d, itemsize) <= budget
    tile_n = n_pad if caps_resident else tile_m

    if pad:
        imgs_p = jnp.pad(imgs, ((0, pad), (0, 0)))
        caps_p = jnp.pad(caps, ((0, pad), (0, 0)))
        # Padded positions: embeddings are zero and (margin - diag) = -1e30, so
        # every term involving a padded diag is relu(-huge) = 0; the remaining
        # cross terms have a closed form subtracted below.
        md_p = jnp.pad(md, (0, pad), constant_values=-1e30)
    else:
        imgs_p, caps_p, md_p = imgs, caps, md

    caps_t = caps_p.T                         # (d, n_pad): MXU-native (K, N) layout
    md_col = md_p.reshape(n_pad, 1)
    md_row = md_p.reshape(1, n_pad)

    gm = n_pad // tile_m
    gn = n_pad // tile_n
    need = _vmem_estimate(tile_m, tile_n, d, itemsize)
    vmem_limit = int(min(vmem_cap - 16 * 1024 * 1024,
                         100 * 1024 * 1024,
                         max(32 * 1024 * 1024, 2 * need)))

    partials = pl.pallas_call(
        _contrastive_kernel,
        out_shape=jax.ShapeDtypeStruct((gm, 1, 1), jnp.float32),
        grid_spec=pltpu.PrefetchScalarGridSpec(
            num_scalar_prefetch=0,
            grid=(gm, gn),
            in_specs=[
                pl.BlockSpec((tile_m, d), lambda i, j: (i, 0)),   # imgs rows
                pl.BlockSpec((d, tile_n), lambda i, j: (0, j)),   # caps^T cols (resident if gn==1)
                pl.BlockSpec((tile_m, 1), lambda i, j: (i, 0)),   # margin - diag (rows)
                pl.BlockSpec((1, tile_n), lambda i, j: (0, j)),   # margin - diag (cols)
            ],
            out_specs=pl.BlockSpec((1, 1, 1), lambda i, j: (i, 0, 0)),
            scratch_shapes=[pltpu.VMEM((1, tile_n), jnp.float32)],
        ),
        compiler_params=pltpu.CompilerParams(
            dimension_semantics=("parallel", "arbitrary"),
            vmem_limit_bytes=vmem_limit,
        ),
    )(imgs_p, caps_t, md_col, md_row)

    total = jnp.sum(partials)
    # Algebraic corrections (O(N) wrapper work, no in-kernel masking):
    #  * each real diagonal element contributed 2*max(margin, 0) before masking;
    #  * padded rows/cols contributed 2 * pad * sum(relu(margin - diag)).
    total = total - 2.0 * max(margin, 0.0) * n
    if pad:
        total = total - 2.0 * pad * jnp.sum(jnp.maximum(md, 0.0))
    return total


def _reference(imgs, caps, margin=0.2):
    scores = jnp.dot(imgs, caps.T, precision=lax.Precision.HIGHEST)
    diag = jnp.diag(scores)
    cost_s = jnp.maximum(margin - diag[None, :] + scores, 0.0)
    cost_im = jnp.maximum(margin - diag[:, None] + scores, 0.0)
    eye = jnp.eye(scores.shape[0], dtype=bool)
    cost_s = jnp.where(eye, 0.0, cost_s)
    cost_im = jnp.where(eye, 0.0, cost_im)
    return cost_s.sum() + cost_im.sum()


if __name__ == "__main__":
    key = jax.random.PRNGKey(0)
    k1, k2, k3, k4 = jax.random.split(key, 4)

    # Primary small case consistent with the module: batch of 8 embeddings, hidden=32.
    N, D = 8, 32
    imgs = jax.random.normal(k1, (N, D), dtype=jnp.float32)
    caps = jax.random.normal(k2, (N, D), dtype=jnp.float32)
    loss = jax.block_until_ready(contrastive_loss(imgs, caps, margin=0.2))
    ref = _reference(imgs, caps, margin=0.2)
    assert jnp.allclose(loss, ref, rtol=1e-4, atol=1e-3), (loss, ref)

    # Exercise the tiled / padded / caps-resident path (N=384 pads to 512, tile_m=256).
    N2, D2 = 384, 64
    imgs2 = jax.random.normal(k3, (N2, D2), dtype=jnp.float32)
    caps2 = jax.random.normal(k4, (N2, D2), dtype=jnp.float32)
    ref2 = _reference(imgs2, caps2, margin=0.2)
    loss2 = jax.block_until_ready(contrastive_loss(imgs2, caps2, margin=0.2))
    assert jnp.allclose(loss2, ref2, rtol=1e-3, atol=1.0), (loss2, ref2)

    # Exercise the multi-column-tile accumulation path (caps streamed, grid 2x2).
    loss3 = jax.block_until_ready(
        contrastive_loss(imgs2, caps2, margin=0.2, caps_resident=False))
    assert jnp.allclose(loss3, ref2, rtol=1e-3, atol=1.0), (loss3, ref2)

    print("KERNEL_OK")
</pallas_src>

<mosaic_0001>
module attributes {stable_mosaic.version = 11 : i64} {
  func.func @_contrastive_kernel(%arg0: i32, %arg1: i32, %arg2: memref<8x32xf32, #tpu.memory_space<vmem>>, %arg3: memref<32x8xf32, #tpu.memory_space<vmem>>, %arg4: memref<8x1xf32, #tpu.memory_space<vmem>>, %arg5: memref<1x8xf32, #tpu.memory_space<vmem>>, %arg6: memref<1x1x1xf32, #tpu.memory_space<vmem>>, %arg7: memref<1x8xf32, #tpu.memory_space<vmem>>) attributes {dimension_semantics = [#tpu.dimension_semantics<parallel>, #tpu.dimension_semantics<arbitrary>], iteration_bounds = array<i64: 1, 1>, scalar_prefetch = 0 : i64, scratch_operands = 1 : i64, tpu.core_type = #tpu.core_type<tc>, window_params = [{transform_indices = @transform_0, window_bounds = array<i64: 8, 32>}, {transform_indices = @transform_1, window_bounds = array<i64: 32, 8>}, {transform_indices = @transform_2, window_bounds = array<i64: 8, 1>}, {transform_indices = @transform_3, window_bounds = array<i64: 1, 8>}, {transform_indices = @transform_4, window_bounds = array<i64: 1, 1, 1>}]} {
    %c0_i32 = arith.constant 0 : i32
    %0 = arith.cmpi eq, %arg1, %c0_i32 : i32
    %1 = arith.extui %0 : i1 to i32
    %c0_i32_0 = arith.constant 0 : i32
    %2 = arith.cmpi ne, %1, %c0_i32_0 : i32
    scf.if %2 {
      %cst_17 = arith.constant 0.000000e+00 : f32
      %25 = vector.broadcast %cst_17 : f32 to vector<1x8xf32>
      %c0_18 = arith.constant 0 : index
      %c0_19 = arith.constant 0 : index
      %26 = vector.load %arg7[%c0_18, %c0_19] : memref<1x8xf32, #tpu.memory_space<vmem>>, vector<1x8xf32>
      tpu.vector_store %arg7[%c0_18, %c0_19], %25 {strides = array<i32>} : memref<1x8xf32, #tpu.memory_space<vmem>>, vector<1x8xf32>,
    } else {
    }
    %c0 = arith.constant 0 : index
    %c0_1 = arith.constant 0 : index
    %3 = vector.load %arg2[%c0, %c0_1] : memref<8x32xf32, #tpu.memory_space<vmem>>, vector<8x32xf32>
    %c0_2 = arith.constant 0 : index
    %c0_3 = arith.constant 0 : index
    %4 = vector.load %arg3[%c0_2, %c0_3] : memref<32x8xf32, #tpu.memory_space<vmem>>, vector<32x8xf32>
    %cst = arith.constant dense<0.000000e+00> : vector<8x8xf32>
    %5 = tpu.matmul %3, %4, %cst {dimension_numbers = #tpu.dot_dimension_numbers<[1], [0], [0], [1], [0, 0, 1, 1], [], []>} : vector<8x32xf32>, vector<32x8xf32>, vector<8x8xf32> -> vector<8x8xf32>
    %c0_4 = arith.constant 0 : index
    %c0_5 = arith.constant 0 : index
    %6 = vector.load %arg4[%c0_4, %c0_5] : memref<8x1xf32, #tpu.memory_space<vmem>>, vector<8x1xf32>
    %c0_6 = arith.constant 0 : index
    %c0_7 = arith.constant 0 : index
    %7 = vector.load %arg5[%c0_6, %c0_7] : memref<1x8xf32, #tpu.memory_space<vmem>>, vector<1x8xf32>
    %8 = vector.broadcast %7 : vector<1x8xf32> to vector<8x8xf32>
    %9 = arith.addf %8, %5 : vector<8x8xf32>
    %cst_8 = arith.constant 0.000000e+00 : f32
    %10 = vector.broadcast %cst_8 : f32 to vector<8x8xf32>
    %11 = arith.maximumf %9, %10 : vector<8x8xf32>
    %12 = vector.broadcast %6 : vector<8x1xf32> to vector<8x8xf32>
    %13 = arith.addf %12, %5 : vector<8x8xf32>
    %cst_9 = arith.constant 0.000000e+00 : f32
    %14 = vector.broadcast %cst_9 : f32 to vector<8x8xf32>
    %15 = arith.maximumf %13, %14 : vector<8x8xf32>
    %16 = arith.addf %11, %15 : vector<8x8xf32>
    %c0_10 = arith.constant 0 : index
    %c0_11 = arith.constant 0 : index
    %17 = vector.load %arg7[%c0_10, %c0_11] : memref<1x8xf32, #tpu.memory_space<vmem>>, vector<1x8xf32>
    %cst_12 = arith.constant dense<0.000000e+00> : vector<8xf32>
    %18 = vector.multi_reduction <add>, %16, %cst_12 [0] : vector<8x8xf32> to vector<8xf32>
    %19 = vector.shape_cast %18 : vector<8xf32> to vector<1x8xf32>
    %20 = arith.addf %17, %19 : vector<1x8xf32>
    %c0_13 = arith.constant 0 : index
    %c0_14 = arith.constant 0 : index
    %21 = vector.load %arg7[%c0_13, %c0_14] : memref<1x8xf32, #tpu.memory_space<vmem>>, vector<1x8xf32>
    tpu.vector_store %arg7[%c0_13, %c0_14], %20 {strides = array<i32>} : memref<1x8xf32, #tpu.memory_space<vmem>>, vector<1x8xf32>,
    %c0_i32_15 = arith.constant 0 : i32
    %22 = arith.cmpi eq, %arg1, %c0_i32_15 : i32
    %23 = arith.extui %22 : i1 to i32
    %c0_i32_16 = arith.constant 0 : i32
    %24 = arith.cmpi ne, %23, %c0_i32_16 : i32
    scf.if %24 {
      %c0_17 = arith.constant 0 : index
      %c0_18 = arith.constant 0 : index
      %25 = vector.load %arg7[%c0_17, %c0_18] : memref<1x8xf32, #tpu.memory_space<vmem>>, vector<1x8xf32>
      %26 = vector.shape_cast %25 : vector<1x8xf32> to vector<1x1x8xf32>
      %cst_19 = arith.constant dense<0.000000e+00> : vector<1xf32>
      %27 = vector.multi_reduction <add>, %26, %cst_19 [1, 2] : vector<1x1x8xf32> to vector<1xf32>
      %28 = vector.shape_cast %27 : vector<1xf32> to vector<1x1x1xf32>
      %29 = vector.extract %28[0, 0, 0] : f32 from vector<1x1x1xf32>
      %30 = vector.broadcast %29 : f32 to vector<1x1xf32>
      %c0_20 = arith.constant 0 : index
      %c0_21 = arith.constant 0 : index
      %c0_22 = arith.constant 0 : index
      %31 = vector.load %arg6[%c0_20, %c0_21, %c0_22] : memref<1x1x1xf32, #tpu.memory_space<vmem>>, vector<1x1x1xf32>
      %32 = vector.shape_cast %31 : vector<1x1x1xf32> to vector<1x1xf32>
      %33 = vector.shape_cast %30 : vector<1x1xf32> to vector<1x1x1xf32>
      tpu.vector_store %arg6[%c0_20, %c0_21, %c0_22], %33 {strides = array<i32>} : memref<1x1x1xf32, #tpu.memory_space<vmem>>, vector<1x1x1xf32>,
    } else {
    }
    return
  }
  func.func @transform_0(%arg0: i32, %arg1: i32) -> (i32, i32) {
    %c0_i32 = arith.constant 0 : i32
    %c0_i32_0 = arith.constant 0 : i32
    return %arg0, %c0_i32 : i32, i32
  }
  func.func @transform_1(%arg0: i32, %arg1: i32) -> (i32, i32) {
    %c0_i32 = arith.constant 0 : i32
    %c0_i32_0 = arith.constant 0 : i32
    return %c0_i32, %arg1 : i32, i32
  }
  func.func @transform_2(%arg0: i32, %arg1: i32) -> (i32, i32) {
    %c0_i32 = arith.constant 0 : i32
    %c0_i32_0 = arith.constant 0 : i32
    return %arg0, %c0_i32 : i32, i32
  }
  func.func @transform_3(%arg0: i32, %arg1: i32) -> (i32, i32) {
    %c0_i32 = arith.constant 0 : i32
    %c0_i32_0 = arith.constant 0 : i32
    return %c0_i32, %arg1 : i32, i32
  }
  func.func @transform_4(%arg0: i32, %arg1: i32) -> (i32, i32, i32) {
    %c0_i32 = arith.constant 0 : i32
    %c0_i32_0 = arith.constant 0 : i32
    %c0_i32_1 = arith.constant 0 : i32
    return %arg0, %c0_i32, %c0_i32_0 : i32, i32, i32
  }
}

</mosaic_0001>

<llo_original>
// kernel: tpu_custom_call.1
$region0: #{tpu_custom_call.1}
  #allocation0 [shape = 'u32[]', space=smem, size = 0x4, offset = 0x4, fixed_abs, tag = 'smem constant byte address 0x4 - core index']
  #allocation1 [shape = 'u32[72,128]{1,0:T(1,128)}', space=vmem, size = 0x9000, scoped, tag = 'internal scratch']
  #allocation2 [shape = 'f32[1,8]{1,0:T(1,128)}', space=vmem, size = 0x200, scoped, tag = 'scratch operand']
  %s0 = inlined_call_operand.vmem [shape: f32[8,32], index: 0, kind: input, shape index: {}]
  %s1 = inlined_call_operand.vmem [shape: f32[32,8], index: 1, kind: input, shape index: {}]
  %s2 = inlined_call_operand.vmem [shape: f32[8,1], index: 2, kind: input, shape index: {}]
  %s3 = inlined_call_operand.vmem [shape: f32[1,8], index: 3, kind: input, shape index: {}]
  %s4 = inlined_call_operand.hbm [shape: f32[1,1,1], index: 4, kind: output, shape index: {}]
  %s5 = sld [smem:[#allocation0]]
  $region34: #{tpu_custom_call.1} parent=0
    _
  %s7 = ssub.s32 1, %s5
  %s8 = scalar_select 0, %s7, %s5
  $region1: #{tpu_custom_call.1} parent=0
    #allocation3 [shape = 'u8[512]{0}', space=vmem, size = 0x400, scoped, tag = 'output window, operand 0, single buffered']
    #allocation4 [shape = 's32[1]{0}', space=sflag, size = 0x4, scoped, tag = 'scoped memory for tpu_custom_call.1']
    %9 = vsyncpa [#allocation4], 0
    // Predicated region
    $region2: #{tpu_custom_call.1} parent=1 // pred_check
      _
    $region3: #{tpu_custom_call.1} parent=1 // pred_check_branch
      %11 = sbr.rel (0) target = $region5
    $region4: #{tpu_custom_call.1} parent=1 // pred_region
      _
    $region5: #{tpu_custom_call.1} parent=1 // pred_fallthru
      _
    // Predicated region
    $region6: #{tpu_custom_call.1} parent=1 // pred_check
      _
    $region7: #{tpu_custom_call.1} parent=1 // pred_check_branch
      %13 = sbr.rel (0) target = $region9
    $region8: #{tpu_custom_call.1} parent=1 // pred_region
      _
    $region9: #{tpu_custom_call.1} parent=1 // pred_fallthru
      _
    // Predicated region
    $region10: #{tpu_custom_call.1} parent=1 // pred_check
      _
    $region11: #{tpu_custom_call.1} parent=1 // pred_check_branch
      %15 = sbr.rel (0) target = $region13
    $region12: #{tpu_custom_call.1} parent=1 // pred_region
      _
    $region13: #{tpu_custom_call.1} parent=1 // pred_fallthru
      _
    // Predicated region
    $region14: #{tpu_custom_call.1} parent=1 // pred_check
      _
    $region15: #{tpu_custom_call.1} parent=1 // pred_check_branch
      %17 = sbr.rel (0) target = $region17
    $region16: #{tpu_custom_call.1} parent=1 // pred_region
      _
    $region17: #{tpu_custom_call.1} parent=1 // pred_fallthru
      _
    %p18 = scmp.eq.s32.totalorder 0, 0
    // Predicated region
    $region18: #{tpu_custom_call.1} parent=1 // pred_check
      %p19 = pneg %p18
    $region19: #{tpu_custom_call.1} parent=1 // pred_check_branch
      %21 = sbr.rel (%p19) target = $region21
    $region20: #{tpu_custom_call.1} parent=1 // pred_region
      %vm22 = vcmask 57344
      %23 = vst.msk [vmem:[#allocation2] sm:$0x1] %vm22, 0.0
    $region21: #{tpu_custom_call.1} parent=1 // pred_fallthru
      _
    %v24 = vld [vmem:[%s0] sm:$0xff]
    %v25 = vld [vmem:[%s1] sm:$0xff]
    %v26 = vld [vmem:[%s1 + $0x8] sm:$0xff]
    %v27 = vld [vmem:[%s1 + $0x10] sm:$0xff]
    %v28 = vld [vmem:[%s1 + $0x18] sm:$0xff]
    %vm29 = vcmask 261120
    %v31 = vsel %vm29, %v24, 0
    %33 = vmatpush.msra.mxu0 0.0
    %34 = vmatpush.msra.mxu0 0.0
    %35 = vmatpush.msra.mxu0 0.0
    %36 = vmatpush.msra.mxu0 0.0
    %37 = vmatpush.msra.mxu0 0.0
    %38 = vmatpush.msra.mxu0 0.0
    %39 = vmatpush.msra.mxu0 0.0
    %40 = vmatpush.msra.mxu0 0.0
    %41 = vmatpush.msra.mxu0 0.0
    %42 = vmatpush.msra.mxu0 0.0
    %43 = vmatpush.msra.mxu0 0.0
    %44 = vmatpush.msra.mxu0 0.0
    %45 = vmatpush.msra.mxu0 %v28
    %46 = vmatpush.msra.mxu0 %v27
    %47 = vmatpush.msra.mxu0 %v26
    %48 = vmatpush.msra.mxu0 %v25
    %49 = vmatmul.f32.gmra.mxu0 %v31
    %v50 = vpop.f32.mrf.mxu0
    %v51 = vadd.f32 0.0, %v50
    %52 = vdwg.mxu0
    %v53 = vld [vmem:[%s2] sm:$0xff]
    %v54 = vld [vmem:[%s3] sm:$0x1]
    %v56 = vperm.slane %v54, 0
    %v58 = vadd.f32 %v56, %v51
    %v59 = vmax.f32 %v58, 0.0
    %61 = vset.pattern.permute.xlu0 0
    %62 = vperm.xlu0 %61, %v53
    %v63 = vpop.permute.xlu0 %62
    %v65 = vadd.f32 %v63, %v51
    %v66 = vmax.f32 %v65, 0.0
    %v67 = vadd.f32 %v59, %v66
    %v68 = vld [vmem:[#allocation2] sm:$0x1]
    %vm69 = vcmask 64512
    %v70 = vsel %vm69, %v67, 0.0
    %v71 = vrot.slane %v70, 4
    %v72 = vadd.f32 %v70, %v71
    %v73 = vrot.slane %v72, 2
    %v74 = vadd.f32 %v72, %v73
    %v75 = vrot.slane %v74, 1
    %v76 = vadd.f32 %v74, %v75
    %v77 = vadd.f32 %v68, %v76
    %vm78 = vcmask 57344
    %79 = vst.msk [vmem:[#allocation2] sm:$0x1] %vm78, %v77
    // Predicated region
    $region22: #{tpu_custom_call.1} parent=1 // pred_check
      %p80 = pneg %p18
    $region23: #{tpu_custom_call.1} parent=1 // pred_check_branch
      %82 = sbr.rel (%p80) target = $region25
    $region24: #{tpu_custom_call.1} parent=1 // pred_region
      %v83 = vld [vmem:[#allocation2] sm:$0x1]
      %v84 = vsel %vm78, %v83, 0.0
      %85 = vadd.xlane.f32.xlu0 %v84
      %v86 = vpop.xlane.xlu0 %85
      %v87 = vrot.slane %v86, 4
      %v88 = vadd.f32 %v86, %v87
      %v89 = vrot.slane %v88, 2
      %v90 = vadd.f32 %v88, %v89
      %v91 = vrot.slane %v90, 1
      %v92 = vadd.f32 %v90, %v91
      %s93 = vtos %v92
      %v94 = vstv %s93
      %vm95 = vcmask 0
      %96 = vst.msk [vmem:[#allocation3] sm:$0x1] %vm95, %v94
    $region25: #{tpu_custom_call.1} parent=1 // pred_fallthru
      _
    // Predicated region
    $region26: #{tpu_custom_call.1} parent=1 // pred_check
      _
    $region27: #{tpu_custom_call.1} parent=1 // pred_check_branch
      %98 = sbr.rel (0) target = $region29
    $region28: #{tpu_custom_call.1} parent=1 // pred_region
      %100 = vsyncadd [#allocation4], 0
      %s102 = sshll.u32 [#allocation3], 4
      %s103 = int_to_ptr.vmem [resolvable:$true] %s102
      %s104 = sshll.u32 %s4, 4
      %s105 = int_to_ptr.hbm [resolvable:$true] %s104
      %107 = dma.vmem_to_hbm [thread:$0]  %s103, 16, %s105, [#allocation4]
    $region29: #{tpu_custom_call.1} parent=1 // pred_fallthru
      _
    // Predicated region
    $region30: #{tpu_custom_call.1} parent=1 // pred_check
      _
    $region31: #{tpu_custom_call.1} parent=1 // pred_check_branch
      %109 = sbr.rel (0) target = $region33
    $region32: #{tpu_custom_call.1} parent=1 // pred_region
      %111 = dma.done [#allocation4], 16
    $region33: #{tpu_custom_call.1} parent=1 // pred_fallthru
      _
    %112 = vsyncpa [#allocation4], 1

</llo_original>
